<compile_context>
chip_gen: v5e
topology: v5e:2x2
jax: 0.10.0
libtpu: 0.0.40
codegen_flags: <defaults>
</compile_context>

<pallas_src>
import functools

import jax
import jax.numpy as jnp
from jax.experimental import pallas as pl
from jax.experimental.pallas import tpu as pltpu


def _round_up(x: int, m: int) -> int:
    return ((x + m - 1) // m) * m


def _mlp_kernel(x_ref, p_ref, out_ref, *, n_in, in_p, n_act, lane):
    """One fused tile of relu(x @ W1 + b1) @ W2 + b2.

    x_ref:   [tb, n_in]                activations (feature dim unpadded)
    p_ref:   [in_p + 8 + lane, lane]   packed parameters:
               rows [0, n_in)               -> W1 (cols [0, H))
               row  in_p                    -> b1, with col H == 1.0
               rows [in_p+8, in_p+8+lane)   -> W2, with row H == b2
    out_ref: [tb, n_act]               Q-values (narrow; no padded HBM write)
    """
    x = x_ref[...]
    w1 = p_ref[0:n_in, :]                        # [n_in, lane]
    b1 = p_ref[in_p:in_p + 1, :]                 # [1, lane]
    w2 = p_ref[in_p + 8:in_p + 8 + lane, :]      # [lane, lane]

    h = jnp.dot(x, w1, preferred_element_type=jnp.float32) + b1
    h = jnp.maximum(h, 0.0)                      # ReLU; h[:, H] == 1.0
    q = jnp.dot(h, w2, preferred_element_type=jnp.float32)  # b2 folded via MXU
    out_ref[...] = q[:, :n_act].astype(out_ref.dtype)


def pack_params(w1, b1, w2, b2):
    """Pack (W1, b1, W2, b2) into ONE lane-dense f32 buffer.

    Hoisted out of the per-call path: call once per parameter update and reuse
    for every forward pass (removes per-call packing ops / HBM round trips).

    Weights are stored transposed vs. PyTorch: W1 is [input_size, 30],
    W2 is [30, nb_action], so the kernel computes x @ W on the MXU directly.
    """
    n_in, n_hid = w1.shape
    n_act = w2.shape[1]
    lane = _round_up(max(n_hid + 1, n_act), 128)
    in_p = _round_up(n_in, 8)
    assert n_hid + 1 <= lane and n_act <= lane

    p = jnp.zeros((in_p + 8 + lane, lane), jnp.float32)
    p = p.at[:n_in, :n_hid].set(w1.astype(jnp.float32))
    # Bias row: b1 in cols [0, H); col H carries a constant 1.0 so that after
    # ReLU the hidden activation h[:, H] == 1 and b2 folds into matmul #2.
    b1_row = jnp.zeros((lane,), jnp.float32)
    b1_row = b1_row.at[:n_hid].set(jnp.ravel(b1).astype(jnp.float32))
    b1_row = b1_row.at[n_hid].set(1.0)
    p = p.at[in_p, :].set(b1_row)
    p = p.at[in_p + 8:in_p + 8 + n_hid, :n_act].set(w2.astype(jnp.float32))
    p = p.at[in_p + 8 + n_hid, :n_act].set(jnp.ravel(b2).astype(jnp.float32))
    return p


@functools.partial(jax.jit,
                   static_argnames=("nb_action", "tb", "single_shot_rows"))
def network_forward(state, packed_params, nb_action,
                    tb: int = 1024, single_shot_rows: int = 4096):
    """Pallas forward of Network: relu(state @ W1 + b1) @ W2 + b2 -> [B, A]."""
    B, n_in = state.shape
    p_rows, lane = packed_params.shape
    in_p = p_rows - 8 - lane                     # recover W1 row padding

    x = state.astype(jnp.float32)                # no wrapper-side zero-pad copy
    kern = functools.partial(_mlp_kernel, n_in=n_in, in_p=in_p,
                             n_act=nb_action, lane=lane)
    out_shape = jax.ShapeDtypeStruct((B, nb_action), jnp.float32)

    if B <= single_shot_rows:
        # Single shot: whole problem resident in VMEM, no grid/pipeline
        # machinery.  ~8 MiB physical VMEM at the 4096-row threshold (incl.
        # lane-padded intermediates) -> fits every generation's scoped default.
        vmem = pl.BlockSpec(memory_space=pltpu.MemorySpace.VMEM)
        return pl.pallas_call(
            kern,
            out_shape=out_shape,
            in_specs=[vmem, vmem],
            out_specs=vmem,
        )(x, packed_params)

    # Large batches: tile over batch.  tb=1024 keeps the double-buffered
    # footprint ~3 MiB (safe on v5e 16 MiB / v7x 32 MiB scoped defaults) while
    # amortizing the ~0.35 us per-step overhead.  "parallel" lets v7x's two
    # TensorCores split batch tiles (no-op on v5e/v6e); this path is only
    # entered when num_tiles >= 4, so the split always pays off.
    num_tiles = pl.cdiv(B, tb)                   # ragged last tile handled by Pallas
    return pl.pallas_call(
        kern,
        out_shape=out_shape,
        grid=(num_tiles,),
        in_specs=[
            pl.BlockSpec((tb, n_in), lambda i: (i, 0)),
            pl.BlockSpec((p_rows, lane), lambda i: (0, 0)),   # constant index
        ],
        out_specs=pl.BlockSpec((tb, nb_action), lambda i: (i, 0)),
        compiler_params=pltpu.CompilerParams(
            dimension_semantics=("parallel",)),
    )(x, packed_params)


def init_params(key, input_size, nb_action, hidden=30):
    """Deterministic init mimicking PyTorch's nn.Linear uniform init."""
    k1, k2, k3, k4 = jax.random.split(key, 4)
    bound1 = 1.0 / jnp.sqrt(float(input_size))
    bound2 = 1.0 / jnp.sqrt(float(hidden))
    # Stored as [in, out] (transposed vs. PyTorch's [out, in]).
    w1 = jax.random.uniform(k1, (input_size, hidden), jnp.float32, -bound1, bound1)
    b1 = jax.random.uniform(k2, (hidden,), jnp.float32, -bound1, bound1)
    w2 = jax.random.uniform(k3, (hidden, nb_action), jnp.float32, -bound2, bound2)
    b2 = jax.random.uniform(k4, (nb_action,), jnp.float32, -bound2, bound2)
    return w1, b1, w2, b2


if __name__ == "__main__":
    # Typical DQN sizes for this module: input_size=5 sensors, nb_action=3.
    input_size, nb_action = 5, 3

    key = jax.random.PRNGKey(0)
    k_p, k_a, k_b, k_c = jax.random.split(key, 4)
    w1, b1, w2, b2 = init_params(k_p, input_size, nb_action)

    # Pack parameters ONCE (per parameter update), reuse across forward calls.
    packed = jax.block_until_ready(pack_params(w1, b1, w2, b2))

    def ref(s):
        return jnp.maximum(s @ w1 + b1, 0.0) @ w2 + b2

    # 1) select_action-style inference: batch of 1 -> single-shot VMEM path.
    s1 = jax.random.normal(k_a, (1, input_size), jnp.float32)
    q1 = jax.block_until_ready(network_forward(s1, packed, nb_action))
    assert q1.shape == (1, nb_action)
    assert jnp.allclose(q1, ref(s1), atol=1e-5, rtol=1e-5)

    # 2) small replay batch -> still the single-shot path (no grid overhead).
    s2 = jax.random.normal(k_b, (8, input_size), jnp.float32)
    q2 = jax.block_until_ready(network_forward(s2, packed, nb_action))
    assert q2.shape == (8, nb_action)
    assert jnp.allclose(q2, ref(s2), atol=1e-5, rtol=1e-5)

    # 3) Exercise the batch-tiled grid path (incl. ragged last tile) at small
    #    shapes by lowering the thresholds for this test only; production
    #    defaults remain tb=1024 / single_shot_rows=4096.
    s3 = jax.random.normal(k_c, (200, input_size), jnp.float32)
    q3 = jax.block_until_ready(
        network_forward(s3, packed, nb_action, tb=64, single_shot_rows=128))
    assert q3.shape == (200, nb_action)
    assert jnp.allclose(q3, ref(s3), atol=1e-5, rtol=1e-5)

    # TODO(synk): a fused argmax-over-actions variant (for action selection)
    # would avoid returning Q-values at all, but forward semantics here must
    # return them.
    print("KERNEL_OK")
</pallas_src>

<mosaic_0001>
module attributes {stable_mosaic.version = 11 : i64} {
  func.func @_mlp_kernel(%arg0: memref<1x5xf32, #tpu.memory_space<vmem>>, %arg1: memref<144x128xf32, #tpu.memory_space<vmem>>, %arg2: memref<1x3xf32, #tpu.memory_space<vmem>>) attributes {dimension_semantics = [], scalar_prefetch = 0 : i64, scratch_operands = 0 : i64, tpu.core_type = #tpu.core_type<tc>} {
    %c0 = arith.constant 0 : index
    %c0_0 = arith.constant 0 : index
    %0 = vector.load %arg0[%c0, %c0_0] : memref<1x5xf32, #tpu.memory_space<vmem>>, vector<1x5xf32>
    %c0_1 = arith.constant 0 : index
    %c0_2 = arith.constant 0 : index
    %1 = vector.load %arg1[%c0_1, %c0_2] : memref<144x128xf32, #tpu.memory_space<vmem>>, vector<5x128xf32>
    %c8 = arith.constant 8 : index
    %c0_3 = arith.constant 0 : index
    %2 = vector.load %arg1[%c8, %c0_3] : memref<144x128xf32, #tpu.memory_space<vmem>>, vector<1x128xf32>
    %c16 = arith.constant 16 : index
    %c0_4 = arith.constant 0 : index
    %3 = vector.load %arg1[%c16, %c0_4] : memref<144x128xf32, #tpu.memory_space<vmem>>, vector<128x128xf32>
    %cst = arith.constant dense<0.000000e+00> : vector<1x128xf32>
    %4 = tpu.matmul %0, %1, %cst {dimension_numbers = #tpu.dot_dimension_numbers<[1], [0], [0], [1], [0, 0, 1, 1], [], []>} : vector<1x5xf32>, vector<5x128xf32>, vector<1x128xf32> -> vector<1x128xf32>
    %5 = arith.addf %4, %2 : vector<1x128xf32>
    %cst_5 = arith.constant 0.000000e+00 : f32
    %6 = vector.broadcast %cst_5 : f32 to vector<1x128xf32>
    %7 = arith.maximumf %5, %6 : vector<1x128xf32>
    %cst_6 = arith.constant dense<0.000000e+00> : vector<1x128xf32>
    %8 = tpu.matmul %7, %3, %cst_6 {dimension_numbers = #tpu.dot_dimension_numbers<[1], [0], [0], [1], [0, 0, 1, 1], [], []>} : vector<1x128xf32>, vector<128x128xf32>, vector<1x128xf32> -> vector<1x128xf32>
    %9 = vector.extract_strided_slice %8 {offsets = [0, 0], sizes = [1, 3], strides = [1, 1]} : vector<1x128xf32> to vector<1x3xf32>
    %c0_7 = arith.constant 0 : index
    %c0_8 = arith.constant 0 : index
    %10 = vector.load %arg2[%c0_7, %c0_8] : memref<1x3xf32, #tpu.memory_space<vmem>>, vector<1x3xf32>
    tpu.vector_store %arg2[%c0_7, %c0_8], %9 {strides = array<i32>} : memref<1x3xf32, #tpu.memory_space<vmem>>, vector<1x3xf32>,
    return
  }
}

</mosaic_0001>

<llo_original>
// kernel: network_forward.1
$region0: #{network_forward.1}
  #allocation0 [shape = 'u32[]', space=smem, size = 0x4, offset = 0x4, fixed_abs, tag = 'smem constant byte address 0x4 - core index']
  #allocation1 [shape = 'u32[72,128]{1,0:T(1,128)}', space=vmem, size = 0x9000, scoped, tag = 'internal scratch']
  %s0 = inlined_call_operand.hbm [shape: f32[1,5], index: 0, kind: input, shape index: {}]
  %s1 = inlined_call_operand.hbm [shape: f32[144,128], index: 1, kind: input, shape index: {}]
  %s2 = inlined_call_operand.hbm [shape: f32[1,3], index: 2, kind: output, shape index: {}]
  %s3 = sld [smem:[#allocation0]]
  $region26: #{network_forward.1} parent=0
    _
  %s5 = ssub.s32 1, %s3
  %s6 = scalar_select 0, %s5, %s3
  $region1: #{network_forward.1} parent=0
    #allocation2 [shape = 'u8[512]{0}', space=vmem, size = 0x400, scoped, tag = 'input window, operand 0, single buffered']
    #allocation3 [shape = 's32[1]{0}', space=sflag, size = 0x4, scoped, tag = 'scoped memory for network_forward.1']
    #allocation4 [shape = 's32[1]{0}', space=sflag, size = 0x4, scoped, tag = 'scoped memory for network_forward.1']
    #allocation5 [shape = 'u8[73728]{0}', space=vmem, size = 0x12000, scoped, tag = 'input window, operand 1, single buffered']
    #allocation6 [shape = 's32[1]{0}', space=sflag, size = 0x4, scoped, tag = 'scoped memory for network_forward.1']
    #allocation7 [shape = 'u8[512]{0}', space=vmem, size = 0x400, scoped, tag = 'output window, operand 0, single buffered']
    %7 = vsyncpa [#allocation3], 0
    %8 = vsyncpa [#allocation6], 0
    %9 = vsyncpa [#allocation4], 0
    // Predicated region
    $region2: #{network_forward.1} parent=1 // pred_check
      _
    $region3: #{network_forward.1} parent=1 // pred_check_branch
      %11 = sbr.rel (0) target = $region5
    $region4: #{network_forward.1} parent=1 // pred_region
      %13 = vsyncadd [#allocation3], 0
      %s15 = sshll.u32 %s0, 4
      %s16 = int_to_ptr.hbm [resolvable:$true] %s15
      %s17 = sshll.u32 [#allocation2], 4
      %s18 = int_to_ptr.vmem [resolvable:$true] %s17
      %20 = dma.hbm_to_vmem [thread:$0]  %s16, 16, %s18, [#allocation3]
    $region5: #{network_forward.1} parent=1 // pred_fallthru
      _
    // Predicated region
    $region6: #{network_forward.1} parent=1 // pred_check
      _
    $region7: #{network_forward.1} parent=1 // pred_check_branch
      %22 = sbr.rel (0) target = $region9
    $region8: #{network_forward.1} parent=1 // pred_region
      %24 = vsyncadd [#allocation6], 0
      %s25 = sshll.u32 %s1, 4
      %s26 = int_to_ptr.hbm [resolvable:$true] %s25
      %s27 = sshll.u32 [#allocation5], 4
      %s28 = int_to_ptr.vmem [resolvable:$true] %s27
      %33 = dma.hbm_to_vmem [thread:$0]  %s26, 2304, %s28, [#allocation6], 128, 128, 8
    $region9: #{network_forward.1} parent=1 // pred_fallthru
      _
    // Predicated region
    $region10: #{network_forward.1} parent=1 // pred_check
      _
    $region11: #{network_forward.1} parent=1 // pred_check_branch
      %35 = sbr.rel (0) target = $region13
    $region12: #{network_forward.1} parent=1 // pred_region
      %37 = dma.done [#allocation3], 16
    $region13: #{network_forward.1} parent=1 // pred_fallthru
      _
    // Predicated region
    $region14: #{network_forward.1} parent=1 // pred_check
      _
    $region15: #{network_forward.1} parent=1 // pred_check_branch
      %39 = sbr.rel (0) target = $region17
    $region16: #{network_forward.1} parent=1 // pred_region
      %41 = dma.done [#allocation6], 2304
    $region17: #{network_forward.1} parent=1 // pred_fallthru
      _
    %v42 = vld [vmem:[#allocation2] sm:$0x1]
    %v43 = vld [vmem:[#allocation5] sm:$0x1f]
    %v44 = vld [vmem:[#allocation5 + $0x8] sm:$0x1]
    %v45 = vld [vmem:[#allocation5 + $0x10] sm:$0xff]
    %v46 = vld [vmem:[#allocation5 + $0x18] sm:$0xff]
    %v47 = vld [vmem:[#allocation5 + $0x20] sm:$0xff]
    %v48 = vld [vmem:[#allocation5 + $0x28] sm:$0xff]
    %v49 = vld [vmem:[#allocation5 + $0x30] sm:$0xff]
    %v50 = vld [vmem:[#allocation5 + $0x38] sm:$0xff]
    %v51 = vld [vmem:[#allocation5 + $0x40] sm:$0xff]
    %v52 = vld [vmem:[#allocation5 + $0x48] sm:$0xff]
    %v53 = vld [vmem:[#allocation5 + $0x50] sm:$0xff]
    %v54 = vld [vmem:[#allocation5 + $0x58] sm:$0xff]
    %v55 = vld [vmem:[#allocation5 + $0x60] sm:$0xff]
    %v56 = vld [vmem:[#allocation5 + $0x68] sm:$0xff]
    %v57 = vld [vmem:[#allocation5 + $0x70] sm:$0xff]
    %v58 = vld [vmem:[#allocation5 + $0x78] sm:$0xff]
    %v59 = vld [vmem:[#allocation5 + $0x80] sm:$0xff]
    %v60 = vld [vmem:[#allocation5 + $0x88] sm:$0xff]
    %vm61 = vcmask 39936
    %v63 = vsel %vm61, %v42, 0
    %vm65 = vcmask 1044480
    %v67 = vsel %vm65, %v43, 0
    %69 = vmatpush.msra.mxu0 0.0
    %70 = vmatpush.msra.mxu0 0.0
    %71 = vmatpush.msra.mxu0 0.0
    %72 = vmatpush.msra.mxu0 0.0
    %73 = vmatpush.msra.mxu0 0.0
    %74 = vmatpush.msra.mxu0 0.0
    %75 = vmatpush.msra.mxu0 0.0
    %76 = vmatpush.msra.mxu0 0.0
    %77 = vmatpush.msra.mxu0 0.0
    %78 = vmatpush.msra.mxu0 0.0
    %79 = vmatpush.msra.mxu0 0.0
    %80 = vmatpush.msra.mxu0 0.0
    %81 = vmatpush.msra.mxu0 0.0
    %82 = vmatpush.msra.mxu0 0.0
    %83 = vmatpush.msra.mxu0 0.0
    %84 = vmatpush.msra.mxu0 %v67
    %85 = vmatmul.f32.gmra.mxu0 %v63
    %v86 = vpop.f32.mrf.mxu0
    %v87 = vadd.f32 %v44, %v86
    %88 = vdwg.mxu0
    %v89 = vmax.f32 %v87, 0.0
    %90 = vmatpush.msra.mxu0 %v60
    %91 = vmatpush.msra.mxu0 %v59
    %92 = vmatpush.msra.mxu0 %v58
    %93 = vmatpush.msra.mxu0 %v57
    %94 = vmatpush.msra.mxu0 %v56
    %95 = vmatpush.msra.mxu0 %v55
    %96 = vmatpush.msra.mxu0 %v54
    %97 = vmatpush.msra.mxu0 %v53
    %98 = vmatpush.msra.mxu0 %v52
    %99 = vmatpush.msra.mxu0 %v51
    %100 = vmatpush.msra.mxu0 %v50
    %101 = vmatpush.msra.mxu0 %v49
    %102 = vmatpush.msra.mxu0 %v48
    %103 = vmatpush.msra.mxu0 %v47
    %104 = vmatpush.msra.mxu0 %v46
    %105 = vmatpush.msra.mxu0 %v45
    %106 = vmatmul.f32.gmra.mxu0 %v89
    %v107 = vpop.f32.mrf.mxu0
    %v108 = vadd.f32 0.0, %v107
    %109 = vdwg.mxu0
    %vm110 = vcmask 16384
    %111 = vst.msk [vmem:[#allocation7] sm:$0x1] %vm110, %v108
    // Predicated region
    $region18: #{network_forward.1} parent=1 // pred_check
      _
    $region19: #{network_forward.1} parent=1 // pred_check_branch
      %113 = sbr.rel (0) target = $region21
    $region20: #{network_forward.1} parent=1 // pred_region
      %115 = vsyncadd [#allocation4], 0
      %s117 = sshll.u32 [#allocation7], 4
      %s118 = int_to_ptr.vmem [resolvable:$true] %s117
      %s119 = sshll.u32 %s2, 4
      %s120 = int_to_ptr.hbm [resolvable:$true] %s119
      %122 = dma.vmem_to_hbm [thread:$0]  %s118, 16, %s120, [#allocation4]
    $region21: #{network_forward.1} parent=1 // pred_fallthru
      _
    // Predicated region
    $region22: #{network_forward.1} parent=1 // pred_check
      _
    $region23: #{network_forward.1} parent=1 // pred_check_branch
      %124 = sbr.rel (0) target = $region25
    $region24: #{network_forward.1} parent=1 // pred_region
      %126 = dma.done [#allocation4], 16
    $region25: #{network_forward.1} parent=1 // pred_fallthru
      _
    %127 = vsyncpa [#allocation3], 1
    %128 = vsyncpa [#allocation6], 1
    %129 = vsyncpa [#allocation4], 1

</llo_original>
